<compile_context>
chip_gen: v7x
topology: tpu7x:2x2x1
jax: 0.10.0
libtpu: 0.0.40
codegen_flags: <defaults>
</compile_context>

<pallas_src>
import functools
import math

import jax
import jax.numpy as jnp
from jax.experimental import pallas as pl
from jax.experimental.pallas import tpu as pltpu

_LANES = 128
_VAR_MIN = 1e-6
_VAR_MAX = 1e6


# --------------------------------------------------------------------------- #
# Small helpers
# --------------------------------------------------------------------------- #
def _sublanes(dtype) -> int:
    # Sublane packing of the native dtype: 8 rows (f32), 16 (bf16), 32 (int8/fp8).
    return max(8, 32 // jnp.dtype(dtype).itemsize)


def _round_up(v: int, m: int) -> int:
    return ((v + m - 1) // m) * m


def _inv_nm1(n: int) -> float:
    # Unbiased (N-1) divisor like torch.Tensor.var; N == 1 -> nan (torch returns
    # nan with a warning for unbiased var of a single element).
    return 1.0 / (n - 1.0) if n > 1 else float("nan")


def _finish(var_f32, o_ref):
    o_ref[...] = jnp.log(jnp.clip(var_f32, _VAR_MIN, _VAR_MAX)).astype(o_ref.dtype)


def _work_budget(block_bytes):
    """f32-equivalent bytes of one input block (the per-block working set)."""
    if block_bytes is not None:
        return int(block_bytes)
    try:
        cap = pltpu.get_tpu_info().vmem_capacity_bytes
    except Exception:
        cap = 64 << 20
    # ~4 MiB is at the measured mem-bound roofline plateau, and keeps the
    # double-buffered input + f32 temporaries far under v7x's 64 MiB VMEM
    # (v5e/v6e have 128 MiB, so this is conservative there too).
    return int(min(4 << 20, max(cap // 12, 1 << 20)))


def _compiler_params(block_elems, itemsize, scratch_bytes, semantics):
    # Room for: double-buffered input block, a few f32-sized temporaries of the
    # block, scratch, and compiler-internal slack.  Capped at 48 MiB so it is
    # always safe on v7x's 64 MiB physical VMEM.
    limit = 2 * block_elems * itemsize + 4 * 4 * block_elems + scratch_bytes + (8 << 20)
    limit = max(24 << 20, min(limit, 48 << 20))
    return pltpu.CompilerParams(
        dimension_semantics=tuple(semantics),
        vmem_limit_bytes=int(limit),
    )


# --------------------------------------------------------------------------- #
# Kernels
# --------------------------------------------------------------------------- #
def _logvar_last_single_kernel(x_ref, o_ref, *, n):
    """Trailing dim, whole reduction axis resident: stable two-pass variance.

    The two cross-lane (XLU) reduces here are the minimum possible: once per
    accumulator per row block.  (An MXU ones-matmul could offload them, but at
    default matmul precision it truncates f32 operands to bf16 and at HIGHEST
    precision it costs as many MXU passes as the XLU chain, so the exact
    VPU+XLU form is kept.)
    """
    x = x_ref[...].astype(jnp.float32)                        # (tr, T)
    mean = jnp.sum(x, axis=-1, keepdims=True) * (1.0 / n)
    d = x - mean
    ssq = jnp.sum(d * d, axis=-1, keepdims=True)
    _finish(ssq * _inv_nm1(n), o_ref)


def _logvar_last_stream_kernel(x_ref, o_ref, sum_ref, ssq_ref, mu_ref, *,
                               n, t_block, t_rem):
    """Trailing dim, streaming over T blocks: lane-parallel shifted sums."""
    ti = pl.program_id(1)
    nt = pl.num_programs(1)

    @pl.when(ti == 0)
    def _init():
        # Pilot shift (mean of the first 128 columns) so the q - s^2/n finalize
        # does not catastrophically cancel when |mean| >> std.
        c0 = x_ref[:, 0:_LANES].astype(jnp.float32)
        mu_ref[...] = jnp.broadcast_to(
            jnp.mean(c0, axis=-1, keepdims=True), mu_ref.shape)
        sum_ref[...] = jnp.zeros_like(sum_ref)
        ssq_ref[...] = jnp.zeros_like(ssq_ref)

    def _accumulate(valid):
        # Lane-parallel partials: static vreg-aligned 128-lane slices, pure VPU
        # adds.  The 128 -> 1 cross-lane (XLU) reduce is deferred to the
        # finalize so it runs once per ROW BLOCK, not once per grid step.
        mu = mu_ref[...]
        s = sum_ref[...]
        q = ssq_ref[...]
        for c in range(0, t_block, _LANES):
            if c >= valid:                       # statically skip padded chunks
                break
            d = x_ref[:, c:c + _LANES].astype(jnp.float32) - mu
            if c + _LANES > valid:               # only the straddling chunk masks
                lane = jax.lax.broadcasted_iota(jnp.int32, d.shape, 1)
                d = jnp.where(lane < (valid - c), d, 0.0)
            s = s + d
            q = q + d * d
        sum_ref[...] = s
        ssq_ref[...] = q

    if t_rem:                                    # ragged last T block (static)
        @pl.when(ti == nt - 1)
        def _ragged_last():
            _accumulate(t_rem)

        @pl.when(ti != nt - 1)
        def _full():
            _accumulate(t_block)
    else:                                        # non-ragged: no mask traced at all
        _accumulate(t_block)

    @pl.when(ti == nt - 1)
    def _finalize():
        s = jnp.sum(sum_ref[...], axis=-1, keepdims=True)
        q = jnp.sum(ssq_ref[...], axis=-1, keepdims=True)
        # Shifted moments: var = (sum((x-mu)^2) - sum(x-mu)^2 / n) / (n - 1).
        var = (q - s * s * (1.0 / n)) * _inv_nm1(n)
        _finish(var, o_ref)


def _logvar_mid_kernel(x_ref, o_ref, *, n):
    """Non-trailing dim: reduce the (sublane) middle axis in-kernel.

    Avoids a wrapper transpose pass over HBM and keeps the output lane-dense.
    """
    x = x_ref[...].astype(jnp.float32)                        # (pt, T, qt)
    mean = jnp.sum(x, axis=1, keepdims=True) * (1.0 / n)
    d = x - mean
    ssq = jnp.sum(d * d, axis=1, keepdims=True)
    _finish(ssq * _inv_nm1(n), o_ref)


# --------------------------------------------------------------------------- #
# pallas_call wrappers
# --------------------------------------------------------------------------- #
def _log_var_last(x2d, budget):
    """log-var over the last axis of a 2-D (rows, T) view."""
    R, T = x2d.shape
    itemsize = jnp.dtype(x2d.dtype).itemsize
    sub = _sublanes(x2d.dtype)
    max_elems = max(budget // 4, sub * _LANES)   # per-block element budget

    # Reduction (T) tiling: keep the whole axis resident when it fits.
    if sub * T <= max_elems:
        tt = T
    else:
        tt = max(_LANES, ((max_elems // sub) // _LANES) * _LANES)

    # Row tiling: multiple of the dtype's sublane packing; split into an even
    # number of ~equal blocks so v7x's two TensorCores see balanced work on the
    # "parallel" axis (harmless extra grid step on single-TC v5e/v6e).
    max_tr = max(sub, ((max_elems // tt) // sub) * sub)
    min_blocks = 2 if R >= 2 * sub else 1
    nblocks = max(min_blocks, pl.cdiv(R, max_tr))
    if nblocks == 1:
        tr = R                                   # full-dim exemption
    else:
        nblocks = _round_up(nblocks, 2)
        tr = _round_up(pl.cdiv(R, nblocks), sub)
    nr = pl.cdiv(R, tr)

    if tt == T:
        # Common FBCNet case: one T block -> no scratch, no init/finalize.
        kernel = functools.partial(_logvar_last_single_kernel, n=T)
        grid = (nr,)
        in_specs = [pl.BlockSpec((tr, T), lambda r: (r, 0))]
        out_specs = pl.BlockSpec((tr, 1), lambda r: (r, 0))
        scratch_shapes = []
        scratch_bytes = 0
        semantics = ("parallel",)
    else:
        kernel = functools.partial(_logvar_last_stream_kernel, n=T,
                                   t_block=tt, t_rem=T % tt)
        grid = (nr, pl.cdiv(T, tt))              # reduction axis last, "arbitrary"
        in_specs = [pl.BlockSpec((tr, tt), lambda r, t: (r, t))]
        out_specs = pl.BlockSpec((tr, 1), lambda r, t: (r, 0))
        scratch_shapes = [pltpu.VMEM((tr, _LANES), jnp.float32),   # sum partials
                          pltpu.VMEM((tr, _LANES), jnp.float32),   # ssq partials
                          pltpu.VMEM((tr, _LANES), jnp.float32)]   # pilot shift
        scratch_bytes = 3 * tr * _LANES * 4
        semantics = ("parallel", "arbitrary")

    return pl.pallas_call(
        kernel,
        out_shape=jax.ShapeDtypeStruct((R, 1), x2d.dtype),
        grid=grid,
        in_specs=in_specs,
        out_specs=out_specs,
        scratch_shapes=scratch_shapes,
        compiler_params=_compiler_params(tr * tt, itemsize, scratch_bytes, semantics),
    )(x2d)


def _log_var_mid(x3d, budget):
    """log-var over the middle axis of a 3-D (pre, T, post) view, or None."""
    P, T, Q = x3d.shape
    itemsize = jnp.dtype(x3d.dtype).itemsize
    max_elems = max(budget // 4, 8 * _LANES)

    if T * min(Q, _LANES) > max_elems:
        return None   # reduction axis too long to keep resident; caller falls back

    qt = Q if T * Q <= max_elems else max(_LANES, ((max_elems // T) // _LANES) * _LANES)
    pt = max(1, min(P, max_elems // (T * qt)))

    return pl.pallas_call(
        functools.partial(_logvar_mid_kernel, n=T),
        out_shape=jax.ShapeDtypeStruct((P, 1, Q), x3d.dtype),
        grid=(pl.cdiv(P, pt), pl.cdiv(Q, qt)),
        in_specs=[pl.BlockSpec((pt, T, qt), lambda i, j: (i, 0, j))],
        out_specs=pl.BlockSpec((pt, 1, qt), lambda i, j: (i, 0, j)),
        compiler_params=_compiler_params(pt * T * qt, itemsize, 0,
                                         ("parallel", "parallel")),
    )(x3d)


def log_var(x: jax.Array, dim: int, *, block_bytes: int | None = None) -> jax.Array:
    """Pallas TPU forward of LogVarLayer:
    log(clamp(var(x, dim=dim, unbiased, keepdim=True), 1e-6, 1e6))."""
    dim = dim % x.ndim
    budget = _work_budget(block_bytes)
    T = x.shape[dim]

    if dim == x.ndim - 1:
        lead = x.shape[:-1]
        out = _log_var_last(x.reshape(math.prod(lead), T), budget)
        return out.reshape(lead + (1,))

    pre = math.prod(x.shape[:dim])
    post = math.prod(x.shape[dim + 1:])
    out = _log_var_mid(x.reshape(pre, T, post), budget)
    if out is not None:
        return out.reshape(x.shape[:dim] + (1,) + x.shape[dim + 1:])

    # Rare fallback (very long non-trailing reduction axis): one transpose pass,
    # then the streaming trailing-dim kernel.
    # TODO(synk): a streaming 3-D (pre, T, post) kernel would avoid this extra HBM pass.
    perm = tuple(i for i in range(x.ndim) if i != dim) + (dim,)
    xt = jnp.transpose(x, perm)
    lead = xt.shape[:-1]
    out = _log_var_last(xt.reshape(math.prod(lead), T), budget).reshape(lead + (1,))
    inv = [0] * x.ndim
    for i, p in enumerate(perm):
        inv[p] = i
    return jnp.transpose(out, inv)


# --------------------------------------------------------------------------- #
# Self-test
# --------------------------------------------------------------------------- #
if __name__ == "__main__":
    key = jax.random.PRNGKey(0)
    k1, k2 = jax.random.split(key, 2)

    def ref(a, d):
        return jnp.log(jnp.clip(jnp.var(a, axis=d, keepdims=True, ddof=1),
                                _VAR_MIN, _VAR_MAX))

    # FBCNet feeds LogVarLayer a (batch, bands*m, strideFactor, time/stride)
    # tensor and reduces over dim=3; add a mean offset to exercise stability.
    x = jax.random.normal(k1, (2, 4, 4, 16), jnp.float32) + 0.5
    y = jax.block_until_ready(log_var(x, dim=3))
    assert y.shape == (2, 4, 4, 1) and y.dtype == x.dtype
    assert jnp.allclose(y, ref(x, 3), atol=1e-4, rtol=1e-4)

    # Non-trailing dim: transpose-free middle-axis kernel.
    y2 = jax.block_until_ready(log_var(x, dim=2))
    assert y2.shape == (2, 4, 1, 16)
    assert jnp.allclose(y2, ref(x, 2), atol=1e-4, rtol=1e-4)

    # Tiny budget forces the streaming multi-T-block kernel (ragged last block,
    # lane-parallel scratch accumulators) and the balanced multi-row-block split.
    xb = jax.random.normal(k2, (64, 1000), jnp.float32)
    y3 = jax.block_until_ready(log_var(xb, dim=1, block_bytes=16 * 1024))
    assert y3.shape == (64, 1)
    assert jnp.allclose(y3, ref(xb, 1), atol=1e-4, rtol=1e-4)

    print("KERNEL_OK")
</pallas_src>

<mosaic_0001>
module attributes {stable_mosaic.version = 11 : i64} {
  func.func @_logvar_last_single_kernel(%arg0: i32, %arg1: memref<16x16xf32, #tpu.memory_space<vmem>>, %arg2: memref<16x1xf32, #tpu.memory_space<vmem>>) attributes {dimension_semantics = [#tpu.dimension_semantics<parallel>], iteration_bounds = array<i64: 2>, scalar_prefetch = 0 : i64, scratch_operands = 0 : i64, tpu.core_type = #tpu.core_type<tc>, window_params = [{transform_indices = @transform_0, window_bounds = array<i64: 16, 16>}, {transform_indices = @transform_1, window_bounds = array<i64: 16, 1>}]} {
    %c0 = arith.constant 0 : index
    %c0_0 = arith.constant 0 : index
    %0 = vector.load %arg1[%c0, %c0_0] : memref<16x16xf32, #tpu.memory_space<vmem>>, vector<16x16xf32>
    %cst = arith.constant dense<0.000000e+00> : vector<16xf32>
    %1 = vector.multi_reduction <add>, %0, %cst [1] : vector<16x16xf32> to vector<16xf32>
    %2 = vector.shape_cast %1 : vector<16xf32> to vector<16x1xf32>
    %cst_1 = arith.constant 6.250000e-02 : f32
    %3 = vector.broadcast %cst_1 : f32 to vector<16x1xf32>
    %4 = arith.mulf %2, %3 : vector<16x1xf32>
    %5 = vector.broadcast %4 : vector<16x1xf32> to vector<16x16xf32>
    %6 = arith.subf %0, %5 : vector<16x16xf32>
    %7 = arith.mulf %6, %6 : vector<16x16xf32>
    %cst_2 = arith.constant dense<0.000000e+00> : vector<16xf32>
    %8 = vector.multi_reduction <add>, %7, %cst_2 [1] : vector<16x16xf32> to vector<16xf32>
    %9 = vector.shape_cast %8 : vector<16xf32> to vector<16x1xf32>
    %cst_3 = arith.constant 0.0666666701 : f32
    %10 = vector.broadcast %cst_3 : f32 to vector<16x1xf32>
    %11 = arith.mulf %9, %10 : vector<16x1xf32>
    %cst_4 = arith.constant 9.99999997E-7 : f32
    %cst_5 = arith.constant 1.000000e+06 : f32
    %12 = vector.broadcast %cst_4 : f32 to vector<16x1xf32>
    %13 = arith.maximumf %12, %11 : vector<16x1xf32>
    %14 = vector.broadcast %cst_5 : f32 to vector<16x1xf32>
    %15 = arith.minimumf %14, %13 : vector<16x1xf32>
    %16 = math.log %15 : vector<16x1xf32>
    %c0_6 = arith.constant 0 : index
    %c0_7 = arith.constant 0 : index
    %17 = vector.load %arg2[%c0_6, %c0_7] : memref<16x1xf32, #tpu.memory_space<vmem>>, vector<16x1xf32>
    tpu.vector_store %arg2[%c0_6, %c0_7], %16 {strides = array<i32>} : memref<16x1xf32, #tpu.memory_space<vmem>>, vector<16x1xf32>,
    return
  }
  func.func @transform_0(%arg0: i32) -> (i32, i32) {
    %c0_i32 = arith.constant 0 : i32
    %c0_i32_0 = arith.constant 0 : i32
    return %arg0, %c0_i32 : i32, i32
  }
  func.func @transform_1(%arg0: i32) -> (i32, i32) {
    %c0_i32 = arith.constant 0 : i32
    %c0_i32_0 = arith.constant 0 : i32
    return %arg0, %c0_i32 : i32, i32
  }
}

</mosaic_0001>

<llo_original>
// kernel: tpu_custom_call.1
$region0: #{tpu_custom_call.1}
  #allocation0 [shape = 'u32[]', space=smem, size = 0x4, offset = 0x4, fixed_abs, tag = 'smem constant byte address 0x4 - core index']
  #allocation1 [shape = 'u32[144,128]{1,0:T(1,128)}', space=vmem, size = 0x12000, scoped, tag = 'internal scratch']
  %s0 = inlined_call_operand.vmem [shape: f32[32,16], index: 0, kind: input, shape index: {}]
  %s1 = inlined_call_operand.vmem [shape: f32[32,1], index: 1, kind: output, shape index: {}]
  %s2 = sld [smem:[#allocation0]]
  $region37: #{tpu_custom_call.1} parent=0
    _
  %s4 = ssub.s32 1, %s2
  %s5 = scalar_select 0, %s4, %s2
  loop: start=0, step=1, limit=4
  $region2: #{tpu_custom_call.1} parent=0 // loop_pre_header
    _
  $region3: #{tpu_custom_call.1} parent=0 // loop_header
    %s7 = sphi 0, %s11
    %p8 = scmp.ge.s32.totalorder %s7, 4
    %s17 = sphi 0, %s19
    %s20 = sphi 0, %s17
    %s21 = sphi 0, %s20
    %s37 = sphi 0, %s21
    %s43 = sphi 0, %s45
    %s46 = sphi 0, %s43
    %s47 = sphi 0, %s46
    %s63 = sphi 0, %s47
  $region4: #{tpu_custom_call.1} parent=0 // loop_header_branch
    %10 = sbr.rel (%p8) target = $region8
  $region5: #{tpu_custom_call.1} parent=0 // loop_body
    %s12 = ssub.s32 %s7, 1
    %s13 = ssub.s32 %s7, 2
    %s14 = sadd.s32 %s7, 1
    %s15 = ssub.s32 %s7, %s14
    %p16 = scmp.eq.s32.totalorder %s15, 0
    %s18 = sadd.s32 %s17, 1
    %s19 = scalar_select %p16, %s17, %s18
    %p22 = pneg %p16
    %p23 = scmp.eq.s32.totalorder %s7, 1
    %p24 = por %p22, %p23
    %p25 = scmp.ne.s32.totalorder %s17, %s20
    %p26 = scmp.eq.s32.totalorder %s7, 0
    %p27 = por %p25, %p26
    %p28 = scmp.ne.s32.totalorder %s17, %s20
    %p29 = scmp.eq.s32.totalorder %s12, 1
    %p30 = por %p28, %p29
    %p31 = scmp.ne.s32.totalorder %s20, %s21
    %p32 = scmp.eq.s32.totalorder %s12, 0
    %p33 = por %p31, %p32
    %p34 = scmp.ne.s32.totalorder %s20, %s21
    %p35 = scmp.eq.s32.totalorder %s13, 1
    %p36 = por %p34, %p35
    %p38 = scmp.ne.s32.totalorder %s21, %s37
    %p39 = scmp.eq.s32.totalorder %s13, 0
    %p40 = por %p38, %p39
    %s41 = ssub.s32 %s7, %s14
    %p42 = scmp.eq.s32.totalorder %s41, 0
    %s44 = sadd.s32 %s43, 1
    %s45 = scalar_select %p42, %s43, %s44
    %p48 = pneg %p42
    %p49 = scmp.eq.s32.totalorder %s7, 1
    %p50 = por %p48, %p49
    %p51 = scmp.ne.s32.totalorder %s43, %s46
    %p52 = scmp.eq.s32.totalorder %s7, 0
    %p53 = por %p51, %p52
    %p54 = scmp.ne.s32.totalorder %s43, %s46
    %p55 = scmp.eq.s32.totalorder %s12, 1
    %p56 = por %p54, %p55
    %p57 = scmp.ne.s32.totalorder %s46, %s47
    %p58 = scmp.eq.s32.totalorder %s12, 0
    %p59 = por %p57, %p58
    %p60 = scmp.ne.s32.totalorder %s46, %s47
    %p61 = scmp.eq.s32.totalorder %s13, 1
    %p62 = por %p60, %p61
    %p64 = scmp.ne.s32.totalorder %s47, %s63
    %p65 = scmp.eq.s32.totalorder %s13, 0
    %p66 = por %p64, %p65
    %p67 = scmp.le.s32.totalorder 1, %s7
    %p68 = scmp.lt.s32.totalorder %s7, 3
    %p69 = pnand %p67, %p68
    %p70 = pneg %p69
    // Predicated region
    $region9: #{tpu_custom_call.1} parent=5 // pred_check
      _
    $region10: #{tpu_custom_call.1} parent=5 // pred_check_branch
      %72 = sbr.rel (%p69) target = $region12
    $region11: #{tpu_custom_call.1} parent=5 // pred_region
      %s73 = ssub.s32 %s7, 1
    $region12: #{tpu_custom_call.1} parent=5 // pred_fallthru
      _
    %p74 = scmp.lt.s32.totalorder %s7, 2
    // Predicated region
    $region13: #{tpu_custom_call.1} parent=5 // pred_check
      %p75 = pneg %p74
    $region14: #{tpu_custom_call.1} parent=5 // pred_check_branch
      %77 = sbr.rel (%p75) target = $region16
    $region15: #{tpu_custom_call.1} parent=5 // pred_region
      // Predicated region
      $region17: #{tpu_custom_call.1} parent=15 // pred_check
        %p78 = pneg %p27
      $region18: #{tpu_custom_call.1} parent=15 // pred_check_branch
        %80 = sbr.rel (%p78) target = $region20
      $region19: #{tpu_custom_call.1} parent=15 // pred_region
        %s81 = smul.u32 2, %s7
        %p82 = scmp.lt.s32.totalorder %s81, 3
        %s83 = scalar_select %p82, %s81, 3
        %s84 = smul.addr %s83, 8
        %s85 = scalar_lea.vmem %s0, %s84
        %s86 = smul.u32 2, %s7
      $region20: #{tpu_custom_call.1} parent=15 // pred_fallthru
        _
    $region16: #{tpu_custom_call.1} parent=5 // pred_fallthru
      _
    %p87 = scmp.le.s32.totalorder 1, %s7
    %p88 = scmp.lt.s32.totalorder %s7, 3
    %p89 = pnand %p87, %p88
    %p90 = pneg %p89
    // Predicated region
    $region21: #{tpu_custom_call.1} parent=5 // pred_check
      _
    $region22: #{tpu_custom_call.1} parent=5 // pred_check_branch
      %92 = sbr.rel (%p89) target = $region24
    $region23: #{tpu_custom_call.1} parent=5 // pred_region
      %s93 = ssub.s32 %s7, 1
      %s94 = smul.u32 2, %s12
      %p95 = scmp.lt.s32.totalorder %s94, 3
      %s96 = scalar_select %p95, %s94, 3
      %s97 = smul.addr %s96, 8
      %s98 = scalar_lea.vmem %s0, %s97
      %p99 = pneg %p33
      %p100 = pneg %p30
      %p101 = pneg %p59
      %p102 = pneg %p56
      %s103 = smul.u32 2, %s12
      %p104 = scmp.lt.s32.totalorder %s103, 3
      %s105 = scalar_select %p104, %s103, 3
      %s106 = smul.addr %s105, 8
      %s107 = scalar_lea.vmem %s1, %s106
      %s108 = smul.u32 2, %s12
      %p109 = scmp.lt.s32.totalorder %s108, 3
      %s110 = scalar_select %p109, %s108, 3
      %s111 = smul.addr %s110, 8
      %s112 = scalar_lea.vmem %s0, %s111
      %s113 = smul.u32 2, %s12
      %s114 = smul.u32 2, %s12
      %p115 = scmp.lt.s32.totalorder %s114, 3
      %s116 = scalar_select %p115, %s114, 3
      %s117 = smul.addr %s116, 8
      %s118 = scalar_lea.vmem %s1, %s117
      %s119 = smul.u32 2, %s12
      %v120 = vld [vmem:[%s112] sm:$0xff]
      %v121 = vld [vmem:[%s112 + $0x8] sm:$0xff]
      %vm122 = vcmask 130048
      %v123 = vsel %vm122, %v120, 0.0
      %124 = vadd.xlane.f32.xlu0 %v123
      %v125 = vpop.xlane.xlu0 %124
      %v126 = vsel %vm122, %v121, 0.0
      %127 = vadd.xlane.f32.xlu0 %v126
      %v128 = vpop.xlane.xlu0 %127
      %v129 = vmul.f32 %v125, 0.0625
      %v130 = vmul.f32 %v128, 0.0625
      %v131 = vsub.f32 %v120, %v129
      %v132 = vsub.f32 %v121, %v130
      %v133 = vmul.f32 %v131, %v131
      %v134 = vmul.f32 %v132, %v132
      %v135 = vsel %vm122, %v133, 0.0
      %136 = vadd.xlane.f32.xlu0 %v135
      %v137 = vpop.xlane.xlu0 %136
      %v138 = vsel %vm122, %v134, 0.0
      %139 = vadd.xlane.f32.xlu0 %v138
      %v140 = vpop.xlane.xlu0 %139
      %v141 = vmul.f32 %v137, 0.06666667
      %v142 = vmul.f32 %v140, 0.06666667
      %v143 = vmax.f32 %v141, 1e-06
      %v144 = vmax.f32 %v142, 1e-06
      %v145 = vmin.f32 %v143, 1000000.0
      %v146 = vmin.f32 %v144, 1000000.0
      %v147 = vlog2.pop %v145
      %v148 = vmul.f32 %v147, 0.6931472
      %v149 = vlog2.pop %v146
      %v150 = vmul.f32 %v149, 0.6931472
      %vm151 = vcmask 7168
      %152 = vst.msk [vmem:[%s118] sm:$0xff] %vm151, %v148
      %153 = vst.msk [vmem:[%s118 + $0x8] sm:$0xff] %vm151, %v150
      %s154 = smul.u32 2, %s12
      %p155 = scmp.lt.s32.totalorder %s154, 3
      %s156 = scalar_select %p155, %s154, 3
      %s157 = smul.addr %s156, 8
      %s158 = scalar_lea.vmem %s1, %s157
      // Predicated region
      $region25: #{tpu_custom_call.1} parent=23 // pred_check
        %p159 = pneg %p56
      $region26: #{tpu_custom_call.1} parent=23 // pred_check_branch
        %161 = sbr.rel (%p159) target = $region28
      $region27: #{tpu_custom_call.1} parent=23 // pred_region
        %s162 = smul.u32 2, %s12
      $region28: #{tpu_custom_call.1} parent=23 // pred_fallthru
        _
    $region24: #{tpu_custom_call.1} parent=5 // pred_fallthru
      _
    %p163 = scmp.le.s32.totalorder 2, %s7
    // Predicated region
    $region29: #{tpu_custom_call.1} parent=5 // pred_check
      %p164 = pneg %p163
    $region30: #{tpu_custom_call.1} parent=5 // pred_check_branch
      %166 = sbr.rel (%p164) target = $region32
    $region31: #{tpu_custom_call.1} parent=5 // pred_region
      %s167 = ssub.s32 %s7, 2
      // Predicated region
      $region33: #{tpu_custom_call.1} parent=31 // pred_check
        %p168 = pneg %p62
      $region34: #{tpu_custom_call.1} parent=31 // pred_check_branch
        %170 = sbr.rel (%p168) target = $region36
      $region35: #{tpu_custom_call.1} parent=31 // pred_region
        %s171 = smul.u32 2, %s13
        %p172 = scmp.lt.s32.totalorder %s171, 3
        %s173 = scalar_select %p172, %s171, 3
        %s174 = smul.addr %s173, 8
        %s175 = scalar_lea.vmem %s1, %s174
      $region36: #{tpu_custom_call.1} parent=31 // pred_fallthru
        _
    $region32: #{tpu_custom_call.1} parent=5 // pred_fallthru
      _
  $region6: #{tpu_custom_call.1} parent=0 // loop_footer
    %s11 = sadd.s32 1, %s7
  $region7: #{tpu_custom_call.1} parent=0 // loop_footer_branch
    %6 = sbr.rel target = $region3
  $region8: #{tpu_custom_call.1} parent=0 // loop_exit
    _

</llo_original>
